<compile_context>
chip_gen: v5e
topology: v5e:2x2
jax: 0.10.0
libtpu: 0.0.40
codegen_flags: <defaults>
</compile_context>

<pallas_src>
import math
from functools import lru_cache

import jax
import jax.numpy as jnp
from jax import lax
from jax.experimental import pallas as pl
from jax.experimental.pallas import tpu as pltpu


def _round_up(x, m):
    return ((x + m - 1) // m) * m


_BUFFERED = getattr(pl, "Buffered", None)
_LOWERING_ERR = getattr(pltpu, "LoweringException", None)
_NARROW_FALLBACK_ERRS = tuple(
    e for e in (TypeError, NotImplementedError, _LOWERING_ERR) if isinstance(e, type))

_SQRT_2_OVER_PI = math.sqrt(2.0 / math.pi)


def _const_block_spec(shape, index_map, single_buffer):
    """BlockSpec for operands whose block index never changes."""
    if single_buffer and _BUFFERED is not None:
        try:
            return pl.BlockSpec(shape, index_map, pipeline_mode=_BUFFERED(1))
        except TypeError:
            pass
    return pl.BlockSpec(shape, index_map)


@lru_cache(maxsize=1)
def _device_info():
    kind = ""
    try:
        dev = jax.devices()[0]
        kind = (getattr(dev, "device_kind", "") or "").lower()
    except Exception:
        pass
    is_v7 = "v7" in kind
    is_v5e = ("v5e" in kind) or ("v5 lite" in kind) or ("v5litepod" in kind)
    is_v6 = "v6" in kind
    num_tc = 2 if is_v7 else 1
    if is_v7:
        vmem_cap = 52 << 20     # 64 MiB physical per TC; leave compiler headroom
    elif is_v6 or is_v5e:
        vmem_cap = 100 << 20    # 128 MiB physical
    else:
        vmem_cap = 64 << 20     # unknown generation: conservative
    return kind, num_tc, vmem_cap, is_v5e, is_v7


def _make_kernel(p_actual, p_pad, tm, compute_dtype, gelu_dtype, gelu_approx):
    inv_sqrt2 = 1.0 / math.sqrt(2.0)
    inv_p = 1.0 / float(p_actual)
    masked = p_actual != p_pad

    # Row-chunked epilogue bounds the (rows, p_pad) f32 temporaries.
    if tm > 128 and tm % 128 == 0:
        epi_rows, n_chunks = 128, tm // 128
    else:
        epi_rows, n_chunks = tm, 1

    def kernel(x_ref, w1_ref, b1_ref, w2_ref, b2_ref, g_ref, bt_ref, o_ref, acc_ref):
        k = pl.program_id(1)

        # ---- Linear 1 partial product (MXU, f32 accumulation) ----
        part = jnp.dot(x_ref[...], w1_ref[...], preferred_element_type=jnp.float32)

        @pl.when(k == 0)
        def _init():
            acc_ref[...] = part          # direct store: no zero-init RMW pass

        @pl.when(k > 0)
        def _accum():
            acc_ref[...] += part

        @pl.when(k == pl.num_programs(1) - 1)
        def _finalize():
            b1 = b1_ref[...]
            b2 = b2_ref[...]
            g = g_ref[...]
            bt = bt_ref[...]

            def epilogue_rows(acc_rows):
                h = acc_rows + b1                                  # f32 bias add
                if gelu_approx:
                    # tanh-approx GELU: one EUP transcendental per element.
                    hg = h.astype(gelu_dtype)
                    hg = 0.5 * hg * (1.0 + jnp.tanh(
                        _SQRT_2_OVER_PI * (hg + 0.044715 * hg * hg * hg)))
                else:
                    # Exact-erf GELU (matches nn.GELU default, f32 path).
                    hg = 0.5 * h * (1.0 + lax.erf(h * inv_sqrt2))

                # ---- Linear 2 (MXU, f32 accumulate) ----
                y = jnp.dot(hg.astype(compute_dtype), w2_ref[...],
                            preferred_element_type=jnp.float32) + b2

                # ---- Dropout: identity in eval mode ----
                # TODO(synk): training-mode dropout (pltpu.prng_* mask) not implemented.

                # ---- LayerNorm over the true feature count (eps = 1e-5) ----
                # Padded lanes of y are exactly zero (W1/W2/b1/b2 pads are zero),
                # so mean/var need no iota/where masking.
                mean = jnp.sum(y, axis=-1, keepdims=True) * inv_p
                if masked:
                    var = jnp.maximum(
                        jnp.sum(y * y, axis=-1, keepdims=True) * inv_p - mean * mean,
                        0.0)
                else:
                    d = y - mean
                    var = jnp.sum(d * d, axis=-1, keepdims=True) * inv_p
                y_norm = (y - mean) * lax.rsqrt(var + 1e-5)
                return (y_norm * g + bt).astype(o_ref.dtype)

            if n_chunks == 1:
                o_ref[...] = epilogue_rows(acc_ref[...])
            else:
                def body(c, carry):
                    r0 = pl.multiple_of(c * epi_rows, epi_rows)
                    o_ref[pl.ds(r0, epi_rows), :] = epilogue_rows(
                        acc_ref[pl.ds(r0, epi_rows), :])
                    return carry
                lax.fori_loop(0, n_chunks, body, 0, unroll=n_chunks <= 4)

    return kernel


def _default_vmem_limit(tm, tk, p_pad, cbytes, obytes, w2_bufs, cap):
    est = (2 * tm * tk * cbytes            # x tiles (double buffered)
           + 2 * tk * p_pad * cbytes       # W1 K-slices (double buffered)
           + w2_bufs * p_pad * p_pad * cbytes   # resident W2
           + 16 * p_pad * 4                # biases / LN affine (f32)
           + 2 * tm * p_pad * obytes       # output tiles
           + 2 * tm * p_pad * 4)           # f32 accumulator + epilogue temps
    est = int(est * 1.25) + (2 << 20)
    return max(16 << 20, min(est, cap))


def _pallas_forward(x_p, w1_p, b1_p, w2_p, b2_p, g_p, bt_p, *, p_actual, tm, tk,
                    compute_dtype, gelu_dtype, gelu_approx, out_dtype,
                    vmem_limit_bytes, single_buffer_consts):
    m_pad, d_pad = x_p.shape
    p_pad = w1_p.shape[1]
    grid = (m_pad // tm, d_pad // tk)

    kernel = _make_kernel(p_actual, p_pad, tm, compute_dtype, gelu_dtype, gelu_approx)

    def cspec(shape):
        return _const_block_spec(shape, lambda i, k: (0, 0), single_buffer_consts)

    cbytes = jnp.dtype(compute_dtype).itemsize
    grid_m = grid[0]
    cost = pl.CostEstimate(
        flops=2 * m_pad * p_pad * (d_pad + p_pad),
        transcendentals=m_pad * p_pad,
        bytes_accessed=(x_p.size * cbytes
                        + grid_m * w1_p.size * cbytes     # W1 re-streamed per row tile
                        + w2_p.size * cbytes
                        + (b1_p.size + b2_p.size + g_p.size + bt_p.size) * 4
                        + m_pad * p_pad * jnp.dtype(out_dtype).itemsize),
    )

    return pl.pallas_call(
        kernel,
        out_shape=jax.ShapeDtypeStruct((m_pad, p_pad), out_dtype),
        grid_spec=pltpu.PrefetchScalarGridSpec(
            num_scalar_prefetch=0,
            grid=grid,
            in_specs=[
                pl.BlockSpec((tm, tk), lambda i, k: (i, k)),      # x row/K tile
                pl.BlockSpec((tk, p_pad), lambda i, k: (k, 0)),   # W1 K-slice
                cspec((1, p_pad)),                                # b1
                cspec((p_pad, p_pad)),                            # W2 (resident)
                cspec((1, p_pad)),                                # b2
                cspec((1, p_pad)),                                # LN gamma
                cspec((1, p_pad)),                                # LN beta
            ],
            out_specs=pl.BlockSpec((tm, p_pad), lambda i, k: (i, 0)),
            scratch_shapes=[pltpu.VMEM((tm, p_pad), jnp.float32)],
        ),
        compiler_params=pltpu.CompilerParams(
            dimension_semantics=("parallel", "arbitrary"),
            vmem_limit_bytes=int(vmem_limit_bytes),
        ),
        cost_estimate=cost,
    )(x_p, w1_p, b1_p, w2_p, b2_p, g_p, bt_p)


def alignment_layer(x, w1, b1, w2, b2, gamma, beta, *, tm=None, tk=None,
                    compute_dtype=jnp.bfloat16, gelu_approximate=None,
                    vmem_limit_bytes=None):
    """Fused Linear -> GELU -> Linear -> Dropout(eval identity) -> LayerNorm.

    x: [..., D_in]; w1: [D_in, P]; w2: [P, P]; b1/b2/gamma/beta: [P] or [1, P].

    Eval-mode only (dropout is identity).  compute_dtype=bf16 (default) uses
    the native bf16 MXU path with f32 accumulation and a tanh-approx GELU;
    compute_dtype=jnp.float32 gives a bit-accurate path (exact-erf GELU).
    Under jit with fixed parameters, pad/cast the weights once outside the
    hot loop (the wrapper skips the pad copy when shapes are already aligned).
    """
    _, num_tc, vmem_cap, is_v5e, is_v7 = _device_info()

    x = jnp.asarray(x)
    w1 = jnp.asarray(w1)
    w2 = jnp.asarray(w2)
    orig_shape = x.shape
    D = orig_shape[-1]
    P = w1.shape[1]
    out_dtype = x.dtype

    cdt = jnp.dtype(compute_dtype)
    if gelu_approximate is None:
        gelu_approximate = cdt != jnp.dtype(jnp.float32)
    gelu_dtype = (jnp.bfloat16
                  if (gelu_approximate and cdt == jnp.dtype(jnp.bfloat16) and not is_v5e)
                  else jnp.float32)

    # Generation-specific defaults: bigger row tiles on v5e/v6e (128 MiB VMEM),
    # smaller on v7x (64 MiB); bigger K tile on v5e to cut accumulator RMW passes.
    if tm is None:
        tm = 256 if is_v7 else 512
    if tk is None:
        tk = 1024 if is_v5e else 512

    x2d = x.reshape(-1, D)
    M = x2d.shape[0]

    row_align = 8 if cdt.itemsize >= 4 else 16

    # Lane-dense feature padding (multiples of 128).
    p_pad = _round_up(P, 128)
    d_pad = _round_up(D, 128)
    tk_eff = max(128, (min(tk, d_pad) // 128) * 128)
    d_pad = _round_up(d_pad, tk_eff)

    # Row tiling.  Only split a single full tile in two when the device actually
    # has 2 TensorCores (v7x megacore); on v5e/v6e it only adds grid steps.
    m_al = _round_up(M, row_align)
    tm_eff = _round_up(min(tm, m_al), row_align)
    if num_tc >= 2 and tm_eff >= m_al and m_al >= 2 * row_align:
        tm_eff = _round_up(m_al // 2, row_align)
    m_pad = _round_up(m_al, tm_eff)

    # Pad + cast operands (skip the pad copy when already aligned).
    def _mat(a, rpad, cpad, dt):
        if rpad or cpad:
            a = jnp.pad(a, ((0, rpad), (0, cpad)))
        return a if a.dtype == dt else a.astype(dt)

    x_p = _mat(x2d, m_pad - M, d_pad - D, cdt)
    w1_p = _mat(w1, d_pad - D, p_pad - P, cdt)
    w2_p = _mat(w2, p_pad - P, p_pad - P, cdt)

    def _vec(v):
        v = jnp.asarray(v, jnp.float32).reshape(1, -1)
        if p_pad != P:
            v = jnp.pad(v, ((0, 0), (0, p_pad - P)))
        return v

    b1_p, b2_p, g_p, bt_p = _vec(b1), _vec(b2), _vec(gamma), _vec(beta)

    # TODO(synk): for very large P on v7x, stream W2 in (p_pad, tn) column blocks
    # via manual DMA instead of keeping the full p_pad^2 block VMEM-resident.

    w2_bufs = 1 if _BUFFERED is not None else 2
    if vmem_limit_bytes is None:
        vmem_limit_bytes = _default_vmem_limit(
            tm_eff, tk_eff, p_pad, cdt.itemsize, jnp.dtype(out_dtype).itemsize,
            w2_bufs, vmem_cap)

    def run(single_buffer_consts):
        return _pallas_forward(
            x_p, w1_p, b1_p, w2_p, b2_p, g_p, bt_p,
            p_actual=P, tm=tm_eff, tk=tk_eff,
            compute_dtype=cdt, gelu_dtype=gelu_dtype, gelu_approx=gelu_approximate,
            out_dtype=out_dtype, vmem_limit_bytes=vmem_limit_bytes,
            single_buffer_consts=single_buffer_consts)

    if _BUFFERED is not None:
        try:
            out_p = run(True)
        except _NARROW_FALLBACK_ERRS:
            # Only pipeline_mode-specific rejections fall back to default
            # (double) buffering; genuine compile/runtime errors propagate.
            out_p = run(False)
    else:
        out_p = run(False)

    out = out_p[:M, :P]
    return out.reshape(orig_shape[:-1] + (P,))


def init_params(key, input_dim, projection_dim, dtype=jnp.float32):
    """Deterministic init mimicking nn.Linear default (uniform +/- 1/sqrt(fan_in))."""
    k1, k2, k3, k4 = jax.random.split(key, 4)
    bound1 = 1.0 / math.sqrt(input_dim)
    bound2 = 1.0 / math.sqrt(projection_dim)
    w1 = jax.random.uniform(k1, (input_dim, projection_dim), dtype, -bound1, bound1)
    b1 = jax.random.uniform(k2, (1, projection_dim), dtype, -bound1, bound1)
    w2 = jax.random.uniform(k3, (projection_dim, projection_dim), dtype, -bound2, bound2)
    b2 = jax.random.uniform(k4, (1, projection_dim), dtype, -bound2, bound2)
    gamma = jnp.ones((1, projection_dim), dtype)
    beta = jnp.zeros((1, projection_dim), dtype)
    return w1, b1, w2, b2, gamma, beta


def reference(x, w1, b1, w2, b2, gamma, beta):
    h = x @ w1 + b1
    h = 0.5 * h * (1.0 + lax.erf(h / math.sqrt(2.0)))
    y = h @ w2 + b2
    mean = jnp.mean(y, -1, keepdims=True)
    var = jnp.mean((y - mean) ** 2, -1, keepdims=True)
    return (y - mean) / jnp.sqrt(var + 1e-5) * gamma + beta


if __name__ == "__main__":
    key = jax.random.PRNGKey(0)
    k_x, k_p, k_x2, k_p2 = jax.random.split(key, 4)

    # Small synthetic shape matching the module (exercises the non-lane-dense /
    # padded-feature LayerNorm path).
    batch, input_dim, projection_dim = 16, 32, 32
    x = jax.random.normal(k_x, (batch, input_dim), jnp.float32)
    params = init_params(k_p, input_dim, projection_dim)
    ref = reference(x, *params)

    # Exact f32 MXU path (erf GELU) -> tight check.
    out_f32 = jax.block_until_ready(
        alignment_layer(x, *params, compute_dtype=jnp.float32))
    assert out_f32.shape == (batch, projection_dim)
    assert jnp.allclose(out_f32, ref, atol=1e-4, rtol=1e-4)

    # Default bf16-MXU / tanh-GELU fast path -> loose check.
    out_bf16 = jax.block_until_ready(alignment_layer(x, *params))
    assert out_bf16.shape == (batch, projection_dim)
    assert jnp.allclose(out_bf16, ref, atol=8e-2, rtol=8e-2)

    # Lane-dense shape (no padding/masking), 3-D input, batch not a tile multiple.
    b3, s3, dim2 = 3, 8, 128
    x2 = jax.random.normal(k_x2, (b3, s3, dim2), jnp.float32)
    params2 = init_params(k_p2, dim2, dim2)
    ref2 = reference(x2, *params2)
    out2 = jax.block_until_ready(
        alignment_layer(x2, *params2, compute_dtype=jnp.float32))
    assert out2.shape == (b3, s3, dim2)
    assert jnp.allclose(out2, ref2, atol=1e-4, rtol=1e-4)

    print("KERNEL_OK")
</pallas_src>

<mosaic_0001>
module attributes {stable_mosaic.version = 11 : i64} {
  func.func @kernel(%arg0: i32, %arg1: i32, %arg2: memref<16x128xf32, #tpu.memory_space<vmem>>, %arg3: memref<128x128xf32, #tpu.memory_space<vmem>>, %arg4: memref<1x128xf32, #tpu.memory_space<vmem>>, %arg5: memref<128x128xf32, #tpu.memory_space<vmem>>, %arg6: memref<1x128xf32, #tpu.memory_space<vmem>>, %arg7: memref<1x128xf32, #tpu.memory_space<vmem>>, %arg8: memref<1x128xf32, #tpu.memory_space<vmem>>, %arg9: memref<16x128xf32, #tpu.memory_space<vmem>>, %arg10: memref<16x128xf32, #tpu.memory_space<vmem>>) attributes {dimension_semantics = [#tpu.dimension_semantics<parallel>, #tpu.dimension_semantics<arbitrary>], iteration_bounds = array<i64: 1, 1>, scalar_prefetch = 0 : i64, scratch_operands = 1 : i64, tpu.core_type = #tpu.core_type<tc>, window_params = [{transform_indices = @transform_0, window_bounds = array<i64: 16, 128>}, {transform_indices = @transform_1, window_bounds = array<i64: 128, 128>}, {pipeline_mode = #tpu.pipeline_mode<synchronous>, transform_indices = @transform_2, window_bounds = array<i64: 1, 128>}, {pipeline_mode = #tpu.pipeline_mode<synchronous>, transform_indices = @transform_3, window_bounds = array<i64: 128, 128>}, {pipeline_mode = #tpu.pipeline_mode<synchronous>, transform_indices = @transform_4, window_bounds = array<i64: 1, 128>}, {pipeline_mode = #tpu.pipeline_mode<synchronous>, transform_indices = @transform_5, window_bounds = array<i64: 1, 128>}, {pipeline_mode = #tpu.pipeline_mode<synchronous>, transform_indices = @transform_6, window_bounds = array<i64: 1, 128>}, {transform_indices = @transform_7, window_bounds = array<i64: 16, 128>}]} {
    %c0 = arith.constant 0 : index
    %c0_0 = arith.constant 0 : index
    %0 = vector.load %arg2[%c0, %c0_0] : memref<16x128xf32, #tpu.memory_space<vmem>>, vector<16x128xf32>
    %c0_1 = arith.constant 0 : index
    %c0_2 = arith.constant 0 : index
    %1 = vector.load %arg3[%c0_1, %c0_2] : memref<128x128xf32, #tpu.memory_space<vmem>>, vector<128x128xf32>
    %cst = arith.constant dense<0.000000e+00> : vector<16x128xf32>
    %2 = tpu.matmul %0, %1, %cst {dimension_numbers = #tpu.dot_dimension_numbers<[1], [0], [0], [1], [0, 0, 1, 1], [], []>} : vector<16x128xf32>, vector<128x128xf32>, vector<16x128xf32> -> vector<16x128xf32>
    %c0_i32 = arith.constant 0 : i32
    %3 = arith.cmpi eq, %arg1, %c0_i32 : i32
    %4 = arith.extui %3 : i1 to i32
    %c0_i32_3 = arith.constant 0 : i32
    %5 = arith.cmpi ne, %4, %c0_i32_3 : i32
    scf.if %5 {
      %c0_8 = arith.constant 0 : index
      %c0_9 = arith.constant 0 : index
      %12 = vector.load %arg10[%c0_8, %c0_9] : memref<16x128xf32, #tpu.memory_space<vmem>>, vector<16x128xf32>
      tpu.vector_store %arg10[%c0_8, %c0_9], %2 {strides = array<i32>} : memref<16x128xf32, #tpu.memory_space<vmem>>, vector<16x128xf32>,
    } else {
    }
    %c0_i32_4 = arith.constant 0 : i32
    %6 = arith.cmpi sgt, %arg1, %c0_i32_4 : i32
    %7 = arith.extui %6 : i1 to i32
    %c0_i32_5 = arith.constant 0 : i32
    %8 = arith.cmpi ne, %7, %c0_i32_5 : i32
    scf.if %8 {
      %c0_8 = arith.constant 0 : index
      %c0_9 = arith.constant 0 : index
      %12 = vector.load %arg10[%c0_8, %c0_9] : memref<16x128xf32, #tpu.memory_space<vmem>>, vector<16x128xf32>
      %13 = arith.addf %12, %2 : vector<16x128xf32>
      %c0_10 = arith.constant 0 : index
      %c0_11 = arith.constant 0 : index
      %14 = vector.load %arg10[%c0_10, %c0_11] : memref<16x128xf32, #tpu.memory_space<vmem>>, vector<16x128xf32>
      tpu.vector_store %arg10[%c0_10, %c0_11], %13 {strides = array<i32>} : memref<16x128xf32, #tpu.memory_space<vmem>>, vector<16x128xf32>,
    } else {
    }
    %c0_i32_6 = arith.constant 0 : i32
    %9 = arith.cmpi eq, %arg1, %c0_i32_6 : i32
    %10 = arith.extui %9 : i1 to i32
    %c0_i32_7 = arith.constant 0 : i32
    %11 = arith.cmpi ne, %10, %c0_i32_7 : i32
    scf.if %11 {
      %c0_8 = arith.constant 0 : index
      %c0_9 = arith.constant 0 : index
      %12 = vector.load %arg4[%c0_8, %c0_9] : memref<1x128xf32, #tpu.memory_space<vmem>>, vector<1x128xf32>
      %c0_10 = arith.constant 0 : index
      %c0_11 = arith.constant 0 : index
      %13 = vector.load %arg6[%c0_10, %c0_11] : memref<1x128xf32, #tpu.memory_space<vmem>>, vector<1x128xf32>
      %c0_12 = arith.constant 0 : index
      %c0_13 = arith.constant 0 : index
      %14 = vector.load %arg7[%c0_12, %c0_13] : memref<1x128xf32, #tpu.memory_space<vmem>>, vector<1x128xf32>
      %c0_14 = arith.constant 0 : index
      %c0_15 = arith.constant 0 : index
      %15 = vector.load %arg8[%c0_14, %c0_15] : memref<1x128xf32, #tpu.memory_space<vmem>>, vector<1x128xf32>
      %c0_16 = arith.constant 0 : index
      %c0_17 = arith.constant 0 : index
      %16 = vector.load %arg10[%c0_16, %c0_17] : memref<16x128xf32, #tpu.memory_space<vmem>>, vector<16x128xf32>
      %17 = vector.broadcast %12 : vector<1x128xf32> to vector<16x128xf32>
      %18 = arith.addf %16, %17 : vector<16x128xf32>
      %cst_18 = arith.constant 5.000000e-01 : f32
      %19 = vector.broadcast %cst_18 : f32 to vector<16x128xf32>
      %20 = arith.mulf %19, %18 : vector<16x128xf32>
      %cst_19 = arith.constant 0.707106769 : f32
      %21 = vector.broadcast %cst_19 : f32 to vector<16x128xf32>
      %22 = arith.mulf %18, %21 : vector<16x128xf32>
      %23 = math.erf %22 : vector<16x128xf32>
      %cst_20 = arith.constant 1.000000e+00 : f32
      %24 = vector.broadcast %cst_20 : f32 to vector<16x128xf32>
      %25 = arith.addf %24, %23 : vector<16x128xf32>
      %26 = arith.mulf %20, %25 : vector<16x128xf32>
      %c0_21 = arith.constant 0 : index
      %c0_22 = arith.constant 0 : index
      %27 = vector.load %arg5[%c0_21, %c0_22] : memref<128x128xf32, #tpu.memory_space<vmem>>, vector<128x128xf32>
      %cst_23 = arith.constant dense<0.000000e+00> : vector<16x128xf32>
      %28 = tpu.matmul %26, %27, %cst_23 {dimension_numbers = #tpu.dot_dimension_numbers<[1], [0], [0], [1], [0, 0, 1, 1], [], []>} : vector<16x128xf32>, vector<128x128xf32>, vector<16x128xf32> -> vector<16x128xf32>
      %29 = vector.broadcast %13 : vector<1x128xf32> to vector<16x128xf32>
      %30 = arith.addf %28, %29 : vector<16x128xf32>
      %cst_24 = arith.constant dense<0.000000e+00> : vector<16xf32>
      %31 = vector.multi_reduction <add>, %30, %cst_24 [1] : vector<16x128xf32> to vector<16xf32>
      %32 = vector.shape_cast %31 : vector<16xf32> to vector<16x1xf32>
      %cst_25 = arith.constant 3.125000e-02 : f32
      %33 = vector.broadcast %cst_25 : f32 to vector<16x1xf32>
      %34 = arith.mulf %32, %33 : vector<16x1xf32>
      %35 = arith.mulf %30, %30 : vector<16x128xf32>
      %cst_26 = arith.constant dense<0.000000e+00> : vector<16xf32>
      %36 = vector.multi_reduction <add>, %35, %cst_26 [1] : vector<16x128xf32> to vector<16xf32>
      %37 = vector.shape_cast %36 : vector<16xf32> to vector<16x1xf32>
      %cst_27 = arith.constant 3.125000e-02 : f32
      %38 = vector.broadcast %cst_27 : f32 to vector<16x1xf32>
      %39 = arith.mulf %37, %38 : vector<16x1xf32>
      %40 = arith.mulf %34, %34 : vector<16x1xf32>
      %41 = arith.subf %39, %40 : vector<16x1xf32>
      %cst_28 = arith.constant 0.000000e+00 : f32
      %42 = vector.broadcast %cst_28 : f32 to vector<16x1xf32>
      %43 = arith.maximumf %41, %42 : vector<16x1xf32>
      %44 = vector.broadcast %34 : vector<16x1xf32> to vector<16x128xf32>
      %45 = arith.subf %30, %44 : vector<16x128xf32>
      %cst_29 = arith.constant 9.99999974E-6 : f32
      %46 = vector.broadcast %cst_29 : f32 to vector<16x1xf32>
      %47 = arith.addf %43, %46 : vector<16x1xf32>
      %48 = math.rsqrt %47 : vector<16x1xf32>
      %49 = vector.broadcast %48 : vector<16x1xf32> to vector<16x128xf32>
      %50 = arith.mulf %45, %49 : vector<16x128xf32>
      %51 = vector.broadcast %14 : vector<1x128xf32> to vector<16x128xf32>
      %52 = arith.mulf %50, %51 : vector<16x128xf32>
      %53 = vector.broadcast %15 : vector<1x128xf32> to vector<16x128xf32>
      %54 = arith.addf %52, %53 : vector<16x128xf32>
      %c0_30 = arith.constant 0 : index
      %c0_31 = arith.constant 0 : index
      %55 = vector.load %arg9[%c0_30, %c0_31] : memref<16x128xf32, #tpu.memory_space<vmem>>, vector<16x128xf32>
      tpu.vector_store %arg9[%c0_30, %c0_31], %54 {strides = array<i32>} : memref<16x128xf32, #tpu.memory_space<vmem>>, vector<16x128xf32>,
    } else {
    }
    return
  }
  func.func @transform_0(%arg0: i32, %arg1: i32) -> (i32, i32) {
    %c0_i32 = arith.constant 0 : i32
    return %arg0, %arg1 : i32, i32
  }
  func.func @transform_1(%arg0: i32, %arg1: i32) -> (i32, i32) {
    %c0_i32 = arith.constant 0 : i32
    %c0_i32_0 = arith.constant 0 : i32
    return %arg1, %c0_i32 : i32, i32
  }
  func.func @transform_2(%arg0: i32, %arg1: i32) -> (i32, i32) {
    %c0_i32 = arith.constant 0 : i32
    %c0_i32_0 = arith.constant 0 : i32
    %c0_i32_1 = arith.constant 0 : i32
    return %c0_i32, %c0_i32_0 : i32, i32
  }
  func.func @transform_3(%arg0: i32, %arg1: i32) -> (i32, i32) {
    %c0_i32 = arith.constant 0 : i32
    %c0_i32_0 = arith.constant 0 : i32
    %c0_i32_1 = arith.constant 0 : i32
    return %c0_i32, %c0_i32_0 : i32, i32
  }
  func.func @transform_4(%arg0: i32, %arg1: i32) -> (i32, i32) {
    %c0_i32 = arith.constant 0 : i32
    %c0_i32_0 = arith.constant 0 : i32
    %c0_i32_1 = arith.constant 0 : i32
    return %c0_i32, %c0_i32_0 : i32, i32
  }
  func.func @transform_5(%arg0: i32, %arg1: i32) -> (i32, i32) {
    %c0_i32 = arith.constant 0 : i32
    %c0_i32_0 = arith.constant 0 : i32
    %c0_i32_1 = arith.constant 0 : i32
    return %c0_i32, %c0_i32_0 : i32, i32
  }
  func.func @transform_6(%arg0: i32, %arg1: i32) -> (i32, i32) {
    %c0_i32 = arith.constant 0 : i32
    %c0_i32_0 = arith.constant 0 : i32
    %c0_i32_1 = arith.constant 0 : i32
    return %c0_i32, %c0_i32_0 : i32, i32
  }
  func.func @transform_7(%arg0: i32, %arg1: i32) -> (i32, i32) {
    %c0_i32 = arith.constant 0 : i32
    %c0_i32_0 = arith.constant 0 : i32
    return %arg0, %c0_i32 : i32, i32
  }
}

</mosaic_0001>

<llo_original>
// kernel: tpu_custom_call.1
$region0: #{tpu_custom_call.1}
  #allocation0 [shape = 'u32[]', space=smem, size = 0x4, offset = 0x4, fixed_abs, tag = 'smem constant byte address 0x4 - core index']
  #allocation1 [shape = 'u32[72,128]{1,0:T(1,128)}', space=vmem, size = 0x9000, scoped, tag = 'internal scratch']
  #allocation2 [shape = 'f32[16,128]{1,0:T(8,128)}', space=vmem, size = 0x2000, scoped, tag = 'scratch operand']
  %s0 = inlined_call_operand.hbm [shape: f32[16,128], index: 0, kind: input, shape index: {}]
  %s1 = inlined_call_operand.hbm [shape: f32[128,128], index: 1, kind: input, shape index: {}]
  %s2 = inlined_call_operand.vmem [shape: f32[1,128], index: 2, kind: input, shape index: {}]
  %s3 = inlined_call_operand.hbm [shape: f32[128,128], index: 3, kind: input, shape index: {}]
  %s4 = inlined_call_operand.vmem [shape: f32[1,128], index: 4, kind: input, shape index: {}]
  %s5 = inlined_call_operand.vmem [shape: f32[1,128], index: 5, kind: input, shape index: {}]
  %s6 = inlined_call_operand.vmem [shape: f32[1,128], index: 6, kind: input, shape index: {}]
  %s7 = inlined_call_operand.hbm [shape: f32[16,128], index: 7, kind: output, shape index: {}]
  %s8 = sld [smem:[#allocation0]]
  $region62: #{tpu_custom_call.1} parent=0
    _
  %s10 = ssub.s32 1, %s8
  %s11 = scalar_select 0, %s10, %s8
  $region1: #{tpu_custom_call.1} parent=0
    #allocation3 [shape = 'u8[8192]{0}', space=vmem, size = 0x2000, scoped, tag = 'input window, operand 0, single buffered']
    #allocation4 [shape = 's32[1]{0}', space=sflag, size = 0x4, scoped, tag = 'scoped memory for tpu_custom_call.1']
    #allocation5 [shape = 's32[1]{0}', space=sflag, size = 0x4, scoped, tag = 'scoped memory for tpu_custom_call.1']
    #allocation6 [shape = 'u8[65536]{0}', space=vmem, size = 0x10000, scoped, tag = 'input window, operand 1, single buffered']
    #allocation7 [shape = 's32[1]{0}', space=sflag, size = 0x4, scoped, tag = 'scoped memory for tpu_custom_call.1']
    #allocation8 [shape = 'u8[65536]{0}', space=vmem, size = 0x10000, scoped, tag = 'input window, operand 3, single buffered']
    #allocation9 [shape = 'u8[8192]{0}', space=vmem, size = 0x2000, scoped, tag = 'output window, operand 0, single buffered']
    %12 = vsyncpa [#allocation4], 0
    %13 = vsyncpa [#allocation7], 0
    %14 = vsyncpa [#allocation5], 0
    // Predicated region
    $region2: #{tpu_custom_call.1} parent=1 // pred_check
      _
    $region3: #{tpu_custom_call.1} parent=1 // pred_check_branch
      %16 = sbr.rel (0) target = $region5
    $region4: #{tpu_custom_call.1} parent=1 // pred_region
      %18 = vsyncadd [#allocation4], 0
      %s19 = sshll.u32 %s0, 4
      %s20 = int_to_ptr.hbm [resolvable:$true] %s19
      %s21 = sshll.u32 [#allocation3], 4
      %s22 = int_to_ptr.vmem [resolvable:$true] %s21
      %27 = dma.hbm_to_vmem [thread:$0]  %s20, 256, %s22, [#allocation4], 128, 128, 8
    $region5: #{tpu_custom_call.1} parent=1 // pred_fallthru
      _
    // Predicated region
    $region6: #{tpu_custom_call.1} parent=1 // pred_check
      _
    $region7: #{tpu_custom_call.1} parent=1 // pred_check_branch
      %29 = sbr.rel (0) target = $region9
    $region8: #{tpu_custom_call.1} parent=1 // pred_region
      %31 = vsyncadd [#allocation7], 0
      %s32 = sshll.u32 %s1, 4
      %s33 = int_to_ptr.hbm [resolvable:$true] %s32
      %s34 = sshll.u32 [#allocation6], 4
      %s35 = int_to_ptr.vmem [resolvable:$true] %s34
      %40 = dma.hbm_to_vmem [thread:$0]  %s33, 2048, %s35, [#allocation7], 128, 128, 8
    $region9: #{tpu_custom_call.1} parent=1 // pred_fallthru
      _
    // Predicated region
    $region10: #{tpu_custom_call.1} parent=1 // pred_check
      _
    $region11: #{tpu_custom_call.1} parent=1 // pred_check_branch
      %42 = sbr.rel (0) target = $region13
    $region12: #{tpu_custom_call.1} parent=1 // pred_region
      _
    $region13: #{tpu_custom_call.1} parent=1 // pred_fallthru
      _
    // Predicated region
    $region14: #{tpu_custom_call.1} parent=1 // pred_check
      _
    $region15: #{tpu_custom_call.1} parent=1 // pred_check_branch
      %44 = sbr.rel (0) target = $region17
    $region16: #{tpu_custom_call.1} parent=1 // pred_region
      %46 = vsyncadd [#allocation7], 0
      %s47 = sshll.u32 %s3, 4
      %s48 = int_to_ptr.hbm [resolvable:$true] %s47
      %s49 = sshll.u32 [#allocation8], 4
      %s50 = int_to_ptr.vmem [resolvable:$true] %s49
      %55 = dma.hbm_to_vmem [thread:$0]  %s48, 2048, %s50, [#allocation7], 128, 128, 8
    $region17: #{tpu_custom_call.1} parent=1 // pred_fallthru
      _
    // Predicated region
    $region18: #{tpu_custom_call.1} parent=1 // pred_check
      _
    $region19: #{tpu_custom_call.1} parent=1 // pred_check_branch
      %57 = sbr.rel (0) target = $region21
    $region20: #{tpu_custom_call.1} parent=1 // pred_region
      _
    $region21: #{tpu_custom_call.1} parent=1 // pred_fallthru
      _
    // Predicated region
    $region22: #{tpu_custom_call.1} parent=1 // pred_check
      _
    $region23: #{tpu_custom_call.1} parent=1 // pred_check_branch
      %59 = sbr.rel (0) target = $region25
    $region24: #{tpu_custom_call.1} parent=1 // pred_region
      _
    $region25: #{tpu_custom_call.1} parent=1 // pred_fallthru
      _
    // Predicated region
    $region26: #{tpu_custom_call.1} parent=1 // pred_check
      _
    $region27: #{tpu_custom_call.1} parent=1 // pred_check_branch
      %61 = sbr.rel (0) target = $region29
    $region28: #{tpu_custom_call.1} parent=1 // pred_region
      _
    $region29: #{tpu_custom_call.1} parent=1 // pred_fallthru
      _
    // Predicated region
    $region30: #{tpu_custom_call.1} parent=1 // pred_check
      _
    $region31: #{tpu_custom_call.1} parent=1 // pred_check_branch
      %63 = sbr.rel (0) target = $region33
    $region32: #{tpu_custom_call.1} parent=1 // pred_region
      %65 = dma.done [#allocation4], 256
    $region33: #{tpu_custom_call.1} parent=1 // pred_fallthru
      _
    // Predicated region
    $region34: #{tpu_custom_call.1} parent=1 // pred_check
      _
    $region35: #{tpu_custom_call.1} parent=1 // pred_check_branch
      %67 = sbr.rel (0) target = $region37
    $region36: #{tpu_custom_call.1} parent=1 // pred_region
      %69 = dma.done [#allocation7], 2048
    $region37: #{tpu_custom_call.1} parent=1 // pred_fallthru
      _
    // Predicated region
    $region38: #{tpu_custom_call.1} parent=1 // pred_check
      _
    $region39: #{tpu_custom_call.1} parent=1 // pred_check_branch
      %71 = sbr.rel (0) target = $region41
    $region40: #{tpu_custom_call.1} parent=1 // pred_region
      %73 = dma.done [#allocation7], 2048
    $region41: #{tpu_custom_call.1} parent=1 // pred_fallthru
      _
    %v74 = vld [vmem:[#allocation3] sm:$0xff]
    %v75 = vld [vmem:[#allocation3 + $0x8] sm:$0xff]
    %v76 = vld [vmem:[#allocation6] sm:$0xff]
    %v77 = vld [vmem:[#allocation6 + $0x8] sm:$0xff]
    %v78 = vld [vmem:[#allocation6 + $0x10] sm:$0xff]
    %v79 = vld [vmem:[#allocation6 + $0x18] sm:$0xff]
    %v80 = vld [vmem:[#allocation6 + $0x20] sm:$0xff]
    %v81 = vld [vmem:[#allocation6 + $0x28] sm:$0xff]
    %v82 = vld [vmem:[#allocation6 + $0x30] sm:$0xff]
    %v83 = vld [vmem:[#allocation6 + $0x38] sm:$0xff]
    %v84 = vld [vmem:[#allocation6 + $0x40] sm:$0xff]
    %v85 = vld [vmem:[#allocation6 + $0x48] sm:$0xff]
    %v86 = vld [vmem:[#allocation6 + $0x50] sm:$0xff]
    %v87 = vld [vmem:[#allocation6 + $0x58] sm:$0xff]
    %v88 = vld [vmem:[#allocation6 + $0x60] sm:$0xff]
    %v89 = vld [vmem:[#allocation6 + $0x68] sm:$0xff]
    %v90 = vld [vmem:[#allocation6 + $0x70] sm:$0xff]
    %v91 = vld [vmem:[#allocation6 + $0x78] sm:$0xff]
    %92 = vmatpush.msra.mxu0 %v91
    %93 = vmatpush.msra.mxu0 %v90
    %94 = vmatpush.msra.mxu0 %v89
    %95 = vmatpush.msra.mxu0 %v88
    %96 = vmatpush.msra.mxu0 %v87
    %97 = vmatpush.msra.mxu0 %v86
    %98 = vmatpush.msra.mxu0 %v85
    %99 = vmatpush.msra.mxu0 %v84
    %100 = vmatpush.msra.mxu0 %v83
    %101 = vmatpush.msra.mxu0 %v82
    %102 = vmatpush.msra.mxu0 %v81
    %103 = vmatpush.msra.mxu0 %v80
    %104 = vmatpush.msra.mxu0 %v79
    %105 = vmatpush.msra.mxu0 %v78
    %106 = vmatpush.msra.mxu0 %v77
    %107 = vmatpush.msra.mxu0 %v76
    %108 = vmatmul.f32.gmra.mxu0 %v74
    %v109 = vpop.f32.mrf.mxu0
    %v110 = vadd.f32 0.0, %v109
    %111 = vmatmul.f32.gmra.mxu0 %v75
    %v112 = vpop.f32.mrf.mxu0
    %v113 = vadd.f32 0.0, %v112
    %114 = vdwg.mxu0
    %p115 = scmp.eq.s32.totalorder 0, 0
    // Predicated region
    $region42: #{tpu_custom_call.1} parent=1 // pred_check
      %p116 = pneg %p115
    $region43: #{tpu_custom_call.1} parent=1 // pred_check_branch
      %118 = sbr.rel (%p116) target = $region45
    $region44: #{tpu_custom_call.1} parent=1 // pred_region
      %119 = vst [vmem:[#allocation2] sm:$0xff] %v110
      %120 = vst [vmem:[#allocation2 + $0x8] sm:$0xff] %v113
    $region45: #{tpu_custom_call.1} parent=1 // pred_fallthru
      _
    %p121 = scmp.gt.s32.totalorder 0, 0
    // Predicated region
    $region46: #{tpu_custom_call.1} parent=1 // pred_check
      %p122 = pneg %p121
    $region47: #{tpu_custom_call.1} parent=1 // pred_check_branch
      %124 = sbr.rel (%p122) target = $region49
    $region48: #{tpu_custom_call.1} parent=1 // pred_region
      %v125 = vld [vmem:[#allocation2] sm:$0xff]
      %v126 = vld [vmem:[#allocation2 + $0x8] sm:$0xff]
      %v127 = vadd.f32 %v125, %v110
      %v128 = vadd.f32 %v126, %v113
      %129 = vst [vmem:[#allocation2] sm:$0xff] %v127
      %130 = vst [vmem:[#allocation2 + $0x8] sm:$0xff] %v128
    $region49: #{tpu_custom_call.1} parent=1 // pred_fallthru
      _
    // Predicated region
    $region50: #{tpu_custom_call.1} parent=1 // pred_check
      %p131 = pneg %p115
    $region51: #{tpu_custom_call.1} parent=1 // pred_check_branch
      %133 = sbr.rel (%p131) target = $region53
    $region52: #{tpu_custom_call.1} parent=1 // pred_region
      %v134 = vld [vmem:[%s2] sm:$0x1]
      %v135 = vld [vmem:[%s4] sm:$0x1]
      %v136 = vld [vmem:[%s5] sm:$0x1]
      %v137 = vld [vmem:[%s6] sm:$0x1]
      %v138 = vld [vmem:[#allocation2] sm:$0xff]
      %v139 = vld [vmem:[#allocation2 + $0x8] sm:$0xff]
      %v141 = vperm.slane %v134, 0
      %v143 = vadd.f32 %v138, %v141
      %v144 = vadd.f32 %v139, %v141
      %v145 = vmul.f32 %v143, 0.5
      %v146 = vmul.f32 %v144, 0.5
      %v147 = vmul.f32 %v143, 0.70710677
      %v148 = vmul.f32 %v144, 0.70710677
      %v149 = vmul.f32 %v147, %v147
      %v150 = vmin.f32 16.0, %v149
      %v151 = vmul.f32 %v150, 2.1237322e-06
      %v152 = vadd.f32 %v151, 0.00028619796
      %v153 = vmul.f32 %v150, %v152
      %v154 = vadd.f32 %v153, 0.0036580483
      %v155 = vmul.f32 %v150, %v154
      %v156 = vadd.f32 %v155, 0.05243302
      %v157 = vmul.f32 %v150, %v156
      %v158 = vadd.f32 %v157, 0.18741608
      %v159 = vmul.f32 %v150, %v158
      %v160 = vadd.f32 %v159, 1.1283791
      %v161 = vmul.f32 %v147, %v160
      %v162 = vmul.f32 %v150, 3.8918573e-05
      %v163 = vadd.f32 %v162, 0.001143296
      %v164 = vmul.f32 %v150, %v163
      %v165 = vadd.f32 %v164, 0.014752088
      %v166 = vmul.f32 %v150, %v165
      %v167 = vadd.f32 %v166, 0.112945676
      %v168 = vmul.f32 %v150, %v167
      %v169 = vadd.f32 %v168, 0.4994258
      %v170 = vmul.f32 %v150, %v169
      %v171 = vadd.f32 %v170, 1.0
      %v172 = vrcp.pop %v171
      %v173 = vmul.f32 %v171, %v172
      %v174 = vsub.f32 1.0, %v173
      %v175 = vmul.f32 %v172, %v174
      %v176 = vadd.f32 %v172, %v175
      %vm177 = vweird.f32 %v171
      %vm178 = vweird.f32 %v172
      %vm179 = vmor %vm177, %vm178
      %v180 = vsel %vm179, %v172, %v176
      %v181 = vand.u32 2147483647, %v171
      %vm182 = vcmp.eq.f32.partialorder %v181, 8.507059e+37
      %v183 = vand.u32 %v171, 2147483648
      %v184 = vor.u32 1.1754944e-38, %v183
      %v185 = vsel %vm182, %v184, %v180
      %v186 = vmul.f32 %v161, %v185
      %v187 = vmin.f32 %v186, 1.0
      %v188 = vmax.f32 %v187, -1.0
      %v189 = vmul.f32 %v148, %v148
      %v190 = vmin.f32 16.0, %v189
      %v191 = vmul.f32 %v190, 2.1237322e-06
      %v192 = vadd.f32 %v191, 0.00028619796
      %v193 = vmul.f32 %v190, %v192
      %v194 = vadd.f32 %v193, 0.0036580483
      %v195 = vmul.f32 %v190, %v194
      %v196 = vadd.f32 %v195, 0.05243302
      %v197 = vmul.f32 %v190, %v196
      %v198 = vadd.f32 %v197, 0.18741608
      %v199 = vmul.f32 %v190, %v198
      %v200 = vadd.f32 %v199, 1.1283791
      %v201 = vmul.f32 %v148, %v200
      %v202 = vmul.f32 %v190, 3.8918573e-05
      %v203 = vadd.f32 %v202, 0.001143296
      %v204 = vmul.f32 %v190, %v203
      %v205 = vadd.f32 %v204, 0.014752088
      %v206 = vmul.f32 %v190, %v205
      %v207 = vadd.f32 %v206, 0.112945676
      %v208 = vmul.f32 %v190, %v207
      %v209 = vadd.f32 %v208, 0.4994258
      %v210 = vmul.f32 %v190, %v209
      %v211 = vadd.f32 %v210, 1.0
      %v212 = vrcp.pop %v211
      %v213 = vmul.f32 %v211, %v212
      %v214 = vsub.f32 1.0, %v213
      %v215 = vmul.f32 %v212, %v214
      %v216 = vadd.f32 %v212, %v215
      %vm217 = vweird.f32 %v211
      %vm218 = vweird.f32 %v212
      %vm219 = vmor %vm217, %vm218
      %v220 = vsel %vm219, %v212, %v216
      %v221 = vand.u32 2147483647, %v211
      %vm222 = vcmp.eq.f32.partialorder %v221, 8.507059e+37
      %v223 = vand.u32 %v211, 2147483648
      %v224 = vor.u32 1.1754944e-38, %v223
      %v225 = vsel %vm222, %v224, %v220
      %v226 = vmul.f32 %v201, %v225
      %v227 = vmin.f32 %v226, 1.0
      %v228 = vmax.f32 %v227, -1.0
      %v229 = vadd.f32 %v188, 1.0
      %v230 = vadd.f32 %v228, 1.0
      %v231 = vmul.f32 %v145, %v229
      %v232 = vmul.f32 %v146, %v230
      %v233 = vld [vmem:[#allocation8] sm:$0xff]
      %v234 = vld [vmem:[#allocation8 + $0x8] sm:$0xff]
      %v235 = vld [vmem:[#allocation8 + $0x10] sm:$0xff]
      %v236 = vld [vmem:[#allocation8 + $0x18] sm:$0xff]
      %v237 = vld [vmem:[#allocation8 + $0x20] sm:$0xff]
      %v238 = vld [vmem:[#allocation8 + $0x28] sm:$0xff]
      %v239 = vld [vmem:[#allocation8 + $0x30] sm:$0xff]
      %v240 = vld [vmem:[#allocation8 + $0x38] sm:$0xff]
      %v241 = vld [vmem:[#allocation8 + $0x40] sm:$0xff]
      %v242 = vld [vmem:[#allocation8 + $0x48] sm:$0xff]
      %v243 = vld [vmem:[#allocation8 + $0x50] sm:$0xff]
      %v244 = vld [vmem:[#allocation8 + $0x58] sm:$0xff]
      %v245 = vld [vmem:[#allocation8 + $0x60] sm:$0xff]
      %v246 = vld [vmem:[#allocation8 + $0x68] sm:$0xff]
      %v247 = vld [vmem:[#allocation8 + $0x70] sm:$0xff]
      %v248 = vld [vmem:[#allocation8 + $0x78] sm:$0xff]
      %v250 = vperm.slane %v135, 0
      %252 = vmatpush.msra.mxu0 %v248
      %253 = vmatpush.msra.mxu0 %v247
      %254 = vmatpush.msra.mxu0 %v246
      %255 = vmatpush.msra.mxu0 %v245
      %256 = vmatpush.msra.mxu0 %v244
      %257 = vmatpush.msra.mxu0 %v243
      %258 = vmatpush.msra.mxu0 %v242
      %259 = vmatpush.msra.mxu0 %v241
      %260 = vmatpush.msra.mxu0 %v240
      %261 = vmatpush.msra.mxu0 %v239
      %262 = vmatpush.msra.mxu0 %v238
      %263 = vmatpush.msra.mxu0 %v237
      %264 = vmatpush.msra.mxu0 %v236
      %265 = vmatpush.msra.mxu0 %v235
      %266 = vmatpush.msra.mxu0 %v234
      %267 = vmatpush.msra.mxu0 %v233
      %268 = vmatmul.f32.gmra.mxu0 %v231
      %v269 = vpop.f32.mrf.mxu0
      %v270 = vadd.f32 %v250, %v269
      %271 = vmatmul.f32.gmra.mxu0 %v232
      %v272 = vpop.f32.mrf.mxu0
      %v273 = vadd.f32 %v250, %v272
      %274 = vdwg.mxu0
      %275 = vadd.xlane.f32.xlu0 %v270
      %v276 = vpop.xlane.xlu0 %275
      %277 = vadd.xlane.f32.xlu0 %v273
      %v278 = vpop.xlane.xlu0 %277
      %v279 = vmul.f32 %v276, 0.03125
      %v280 = vmul.f32 %v278, 0.03125
      %v281 = vmul.f32 %v270, %v270
      %v282 = vmul.f32 %v273, %v273
      %283 = vadd.xlane.f32.xlu0 %v281
      %v284 = vpop.xlane.xlu0 %283
      %285 = vadd.xlane.f32.xlu0 %v282
      %v286 = vpop.xlane.xlu0 %285
      %v287 = vmul.f32 %v284, 0.03125
      %v288 = vmul.f32 %v286, 0.03125
      %v289 = vmul.f32 %v279, %v279
      %v290 = vmul.f32 %v280, %v280
      %v291 = vsub.f32 %v287, %v289
      %v292 = vsub.f32 %v288, %v290
      %v293 = vmax.f32 %v291, 0.0
      %v294 = vmax.f32 %v292, 0.0
      %v295 = vsub.f32 %v270, %v279
      %v296 = vsub.f32 %v273, %v280
      %v297 = vadd.f32 %v293, 1e-05
      %v298 = vadd.f32 %v294, 1e-05
      %v299 = vrsqrt.pop %v297
      %v300 = vmul.f32 %v299, %v297
      %v301 = vmul.f32 %v300, %v299
      %v302 = vmul.f32 0.5, %v301
      %v303 = vsub.f32 1.5, %v302
      %v304 = vmul.f32 %v299, %v303
      %vm305 = vweird.f32 %v297
      %vm306 = vweird.f32 %v299
      %vm307 = vmor %vm305, %vm306
      %v308 = vsel %vm307, %v299, %v304
      %v309 = vrsqrt.pop %v298
      %v310 = vmul.f32 %v309, %v298
      %v311 = vmul.f32 %v310, %v309
      %v312 = vmul.f32 0.5, %v311
      %v313 = vsub.f32 1.5, %v312
      %v314 = vmul.f32 %v309, %v313
      %vm315 = vweird.f32 %v298
      %vm316 = vweird.f32 %v309
      %vm317 = vmor %vm315, %vm316
      %v318 = vsel %vm317, %v309, %v314
      %v319 = vmul.f32 %v295, %v308
      %v320 = vmul.f32 %v296, %v318
      %v322 = vperm.slane %v136, 0
      %v324 = vmul.f32 %v319, %v322
      %v325 = vmul.f32 %v320, %v322
      %v327 = vperm.slane %v137, 0
      %v329 = vadd.f32 %v324, %v327
      %v330 = vadd.f32 %v325, %v327
      %331 = vst [vmem:[#allocation9] sm:$0xff] %v329
      %332 = vst [vmem:[#allocation9 + $0x8] sm:$0xff] %v330
    $region53: #{tpu_custom_call.1} parent=1 // pred_fallthru
      _
    // Predicated region
    $region54: #{tpu_custom_call.1} parent=1 // pred_check
      _
    $region55: #{tpu_custom_call.1} parent=1 // pred_check_branch
      %334 = sbr.rel (0) target = $region57
    $region56: #{tpu_custom_call.1} parent=1 // pred_region
      %336 = vsyncadd [#allocation5], 0
      %s337 = sshll.u32 [#allocation9], 4
      %s338 = int_to_ptr.vmem [resolvable:$true] %s337
      %s339 = sshll.u32 %s7, 4
      %s340 = int_to_ptr.hbm [resolvable:$true] %s339
      %345 = dma.vmem_to_hbm [thread:$0]  %s338, 256, %s340, [#allocation5], 128, 128, 8
    $region57: #{tpu_custom_call.1} parent=1 // pred_fallthru
      _
    // Predicated region
    $region58: #{tpu_custom_call.1} parent=1 // pred_check
      _
    $region59: #{tpu_custom_call.1} parent=1 // pred_check_branch
      %347 = sbr.rel (0) target = $region61
    $region60: #{tpu_custom_call.1} parent=1 // pred_region
      %349 = dma.done [#allocation5], 256
    $region61: #{tpu_custom_call.1} parent=1 // pred_fallthru
      _
    %350 = vsyncpa [#allocation4], 1
    %351 = vsyncpa [#allocation7], 1
    %352 = vsyncpa [#allocation5], 1

</llo_original>
